<compile_context>
chip_gen: v7x
topology: tpu7x:2x2x1
jax: 0.10.0
libtpu: 0.0.40
codegen_flags: <defaults>
</compile_context>

<pallas_src>
import math

import jax
import jax.numpy as jnp
from jax.experimental import pallas as pl
from jax.experimental.pallas import tpu as pltpu


def _round_up(x, m):
    return (x + m - 1) // m * m


# ---------------------------------------------------------------------------
# Kernels
# ---------------------------------------------------------------------------

def _dense_kernel_f32_out(x_ref, w_ref, b_ref, o_ref):
    """f32 output doubles as the accumulator (o tile resident across k)."""
    k = pl.program_id(2)

    @pl.when(k == 0)
    def _init():
        # Fold the bias into the accumulator init: no separate add pass.
        o_ref[...] = jnp.broadcast_to(b_ref[...], o_ref.shape)

    o_ref[...] += jnp.dot(x_ref[...], w_ref[...],
                          preferred_element_type=jnp.float32)


def _dense_kernel_acc(x_ref, w_ref, b_ref, o_ref, acc_ref):
    """Narrow-output variant: accumulate in f32 scratch, cast on last k."""
    k = pl.program_id(2)

    @pl.when(k == 0)
    def _init():
        acc_ref[...] = jnp.broadcast_to(b_ref[...], acc_ref.shape)

    acc_ref[...] += jnp.dot(x_ref[...], w_ref[...],
                            preferred_element_type=jnp.float32)

    @pl.when(k == pl.num_programs(2) - 1)
    def _store():
        o_ref[...] = acc_ref[...].astype(o_ref.dtype)


# ---------------------------------------------------------------------------
# Module-like wrapper: weight prep happens once, forward is thin.
# ---------------------------------------------------------------------------

class PallasDense:
    """y = x @ W^T + b, then a trailing unsqueeze, as a Pallas TPU kernel.

    Weight layout matches torch.nn.Linear: weight (D_out, D_in), bias (D_out,).
    """

    def __init__(self, weight, bias, *,
                 compute_dtype=jnp.bfloat16,   # bf16 operands, f32 accumulate
                 out_dtype=jnp.float32,        # matches nn.Linear numerics
                 tm_cap=512, tn_cap=512, tk_cap=1024):
        weight = jnp.asarray(weight)
        bias = jnp.asarray(bias)
        self.D_out, self.D_in = weight.shape
        assert bias.shape == (self.D_out,)

        self.compute_dtype = compute_dtype
        self.out_dtype = out_dtype
        self.tm_cap = int(tm_cap)

        # --- K (contraction) and N (output) tiles --------------------------
        # Lane rule: last block dim must be a 128-multiple or the full dim.
        self.tk = self.D_in if self.D_in <= tk_cap else tk_cap
        self.K_pad = _round_up(self.D_in, self.tk)
        self.tn = self.D_out if self.D_out <= tn_cap else tn_cap

        # --- one-time weight / bias prep ------------------------------------
        w_t = weight.T                                   # (D_in, D_out)
        if compute_dtype is not None:
            w_t = w_t.astype(compute_dtype)
        if self.K_pad != self.D_in:
            # Zero-padding of K is load-bearing: padded rows must contribute 0.
            w_t = jnp.pad(w_t, ((0, self.K_pad - self.D_in), (0, 0)))
        self.w_p = w_t                                   # (K_pad, D_out)
        self.b_p = bias.reshape(1, self.D_out).astype(jnp.float32)

    def __call__(self, x):
        lead = x.shape[:-1]
        assert x.shape[-1] == self.D_in
        B = int(math.prod(lead)) if lead else 1
        x2 = x.reshape(B, self.D_in)

        # Align operand dtypes unconditionally (avoid mixed-dtype dots).
        if self.compute_dtype is not None:
            x2 = x2.astype(self.compute_dtype)
        elif x2.dtype != self.w_p.dtype:
            x2 = x2.astype(self.w_p.dtype)

        # Only K is ever padded (zeros required); M/N use cdiv + masked writes.
        if self.K_pad != self.D_in:
            x2 = jnp.pad(x2, ((0, 0), (0, self.K_pad - self.D_in)))

        tm = min(self.tm_cap, _round_up(B, 16))   # 16: bf16 sublane packing
        tn, tk = self.tn, self.tk
        grid = (pl.cdiv(B, tm), pl.cdiv(self.D_out, tn), self.K_pad // tk)

        use_scratch = jnp.dtype(self.out_dtype) != jnp.dtype(jnp.float32)
        kernel = _dense_kernel_acc if use_scratch else _dense_kernel_f32_out
        scratch = [pltpu.VMEM((tm, tn), jnp.float32)] if use_scratch else []

        # VMEM budget: double-buffered x/W/bias + out tile (+ optional acc).
        cd = jnp.dtype(x2.dtype).itemsize
        od = jnp.dtype(self.out_dtype).itemsize
        working = (2 * (tm * tk * cd + tk * tn * cd + tn * 4)
                   + 2 * tm * tn * od + (tm * tn * 4 if use_scratch else 0))
        vmem_limit = int(min(60 * 2**20, max(32 * 2**20, 2 * working)))

        cost = pl.CostEstimate(
            flops=2 * B * self.D_out * self.K_pad,
            transcendentals=0,
            bytes_accessed=int(x2.size * cd + self.w_p.size * cd
                               + self.b_p.size * 4 + B * self.D_out * od),
        )

        out = pl.pallas_call(
            kernel,
            out_shape=jax.ShapeDtypeStruct((B, self.D_out), self.out_dtype),
            grid_spec=pltpu.PrefetchScalarGridSpec(
                num_scalar_prefetch=0,
                grid=grid,
                in_specs=[
                    pl.BlockSpec((tm, tk), lambda i, j, k: (i, k)),   # x tile
                    pl.BlockSpec((tk, tn), lambda i, j, k: (k, j)),   # W tile
                    pl.BlockSpec((1, tn), lambda i, j, k: (0, j)),    # bias
                ],
                out_specs=pl.BlockSpec((tm, tn), lambda i, j, k: (i, j)),
                scratch_shapes=scratch,
            ),
            compiler_params=pltpu.CompilerParams(
                dimension_semantics=("parallel", "parallel", "arbitrary"),
                vmem_limit_bytes=vmem_limit),
            cost_estimate=cost,
        )(x2, self.w_p, self.b_p)

        # Glue: the [..., None] from the PyTorch forward.
        return out.reshape(*lead, self.D_out)[..., None]


if __name__ == "__main__":
    # Dense applied over a (batch, seq, hidden) activation, like nn.Linear.
    batch, seq, D_in, D_out = 2, 8, 32, 16

    key = jax.random.PRNGKey(0)
    kx, kw, kb = jax.random.split(key, 3)

    # PyTorch nn.Linear default init: U(-1/sqrt(in), 1/sqrt(in)); torch layout.
    bound = 1.0 / math.sqrt(D_in)
    weight = jax.random.uniform(kw, (D_out, D_in), jnp.float32, -bound, bound)
    bias = jax.random.uniform(kb, (D_out,), jnp.float32, -bound, bound)
    x = jax.random.normal(kx, (batch, seq, D_in), jnp.float32)

    dense = PallasDense(weight, bias)      # one-time weight/bias prep
    y = jax.block_until_ready(dense(x))

    # Reference with the same bf16 operand cast (f32 accumulation).
    x_c = x.astype(jnp.bfloat16).astype(jnp.float32)
    w_c = weight.astype(jnp.bfloat16).astype(jnp.float32)
    ref = (x_c @ w_c.T + bias)[..., None]

    assert y.shape == (batch, seq, D_out, 1), y.shape
    assert jnp.allclose(y, ref, atol=1e-4, rtol=1e-4)
    # Loose sanity check against pure-f32 math as well.
    ref_f32 = (x @ weight.T + bias)[..., None]
    assert jnp.allclose(y, ref_f32, atol=3e-2, rtol=3e-2)

    print("KERNEL_OK")
</pallas_src>

<mosaic_0001>
module attributes {stable_mosaic.version = 11 : i64} {
  func.func @_dense_kernel_f32_out(%arg0: i32, %arg1: i32, %arg2: i32, %arg3: memref<16x32xbf16, #tpu.memory_space<vmem>>, %arg4: memref<32x16xbf16, #tpu.memory_space<vmem>>, %arg5: memref<1x16xf32, #tpu.memory_space<vmem>>, %arg6: memref<16x16xf32, #tpu.memory_space<vmem>>) attributes {dimension_semantics = [#tpu.dimension_semantics<parallel>, #tpu.dimension_semantics<parallel>, #tpu.dimension_semantics<arbitrary>], iteration_bounds = array<i64: 1, 1, 1>, scalar_prefetch = 0 : i64, scratch_operands = 0 : i64, tpu.core_type = #tpu.core_type<tc>, window_params = [{transform_indices = @transform_0, window_bounds = array<i64: 16, 32>}, {transform_indices = @transform_1, window_bounds = array<i64: 32, 16>}, {transform_indices = @transform_2, window_bounds = array<i64: 1, 16>}, {transform_indices = @transform_3, window_bounds = array<i64: 16, 16>}]} {
    %c0_i32 = arith.constant 0 : i32
    %0 = arith.cmpi eq, %arg2, %c0_i32 : i32
    %1 = arith.extui %0 : i1 to i32
    %c0_i32_0 = arith.constant 0 : i32
    %2 = arith.cmpi ne, %1, %c0_i32_0 : i32
    scf.if %2 {
      %c0_8 = arith.constant 0 : index
      %c0_9 = arith.constant 0 : index
      %9 = vector.load %arg5[%c0_8, %c0_9] : memref<1x16xf32, #tpu.memory_space<vmem>>, vector<1x16xf32>
      %10 = vector.shape_cast %9 : vector<1x16xf32> to vector<1x16xf32>
      %11 = vector.broadcast %10 : vector<1x16xf32> to vector<16x16xf32>
      %c0_10 = arith.constant 0 : index
      %c0_11 = arith.constant 0 : index
      %12 = vector.load %arg6[%c0_10, %c0_11] : memref<16x16xf32, #tpu.memory_space<vmem>>, vector<16x16xf32>
      tpu.vector_store %arg6[%c0_10, %c0_11], %11 {strides = array<i32>} : memref<16x16xf32, #tpu.memory_space<vmem>>, vector<16x16xf32>,
    } else {
    }
    %c0 = arith.constant 0 : index
    %c0_1 = arith.constant 0 : index
    %3 = vector.load %arg6[%c0, %c0_1] : memref<16x16xf32, #tpu.memory_space<vmem>>, vector<16x16xf32>
    %c0_2 = arith.constant 0 : index
    %c0_3 = arith.constant 0 : index
    %4 = vector.load %arg3[%c0_2, %c0_3] : memref<16x32xbf16, #tpu.memory_space<vmem>>, vector<16x32xbf16>
    %c0_4 = arith.constant 0 : index
    %c0_5 = arith.constant 0 : index
    %5 = vector.load %arg4[%c0_4, %c0_5] : memref<32x16xbf16, #tpu.memory_space<vmem>>, vector<32x16xbf16>
    %cst = arith.constant dense<0.000000e+00> : vector<16x16xf32>
    %6 = tpu.matmul %4, %5, %cst {dimension_numbers = #tpu.dot_dimension_numbers<[1], [0], [0], [1], [0, 0, 1, 1], [], []>} : vector<16x32xbf16>, vector<32x16xbf16>, vector<16x16xf32> -> vector<16x16xf32>
    %7 = arith.addf %3, %6 : vector<16x16xf32>
    %c0_6 = arith.constant 0 : index
    %c0_7 = arith.constant 0 : index
    %8 = vector.load %arg6[%c0_6, %c0_7] : memref<16x16xf32, #tpu.memory_space<vmem>>, vector<16x16xf32>
    tpu.vector_store %arg6[%c0_6, %c0_7], %7 {strides = array<i32>} : memref<16x16xf32, #tpu.memory_space<vmem>>, vector<16x16xf32>,
    return
  }
  func.func @transform_0(%arg0: i32, %arg1: i32, %arg2: i32) -> (i32, i32) {
    %c0_i32 = arith.constant 0 : i32
    return %arg0, %arg2 : i32, i32
  }
  func.func @transform_1(%arg0: i32, %arg1: i32, %arg2: i32) -> (i32, i32) {
    %c0_i32 = arith.constant 0 : i32
    return %arg2, %arg1 : i32, i32
  }
  func.func @transform_2(%arg0: i32, %arg1: i32, %arg2: i32) -> (i32, i32) {
    %c0_i32 = arith.constant 0 : i32
    %c0_i32_0 = arith.constant 0 : i32
    return %c0_i32, %arg1 : i32, i32
  }
  func.func @transform_3(%arg0: i32, %arg1: i32, %arg2: i32) -> (i32, i32) {
    %c0_i32 = arith.constant 0 : i32
    return %arg0, %arg1 : i32, i32
  }
}

</mosaic_0001>

<llo_original>
// kernel: tpu_custom_call.1
$region0: #{tpu_custom_call.1}
  #allocation0 [shape = 'u32[]', space=smem, size = 0x4, offset = 0x4, fixed_abs, tag = 'smem constant byte address 0x4 - core index']
  #allocation1 [shape = 'u32[144,128]{1,0:T(1,128)}', space=vmem, size = 0x12000, scoped, tag = 'internal scratch']
  %s0 = inlined_call_operand.vmem [shape: bf16[16,32], index: 0, kind: input, shape index: {}]
  %s1 = inlined_call_operand.vmem [shape: bf16[32,16], index: 1, kind: input, shape index: {}]
  %s2 = inlined_call_operand.vmem [shape: f32[1,16], index: 2, kind: input, shape index: {}]
  %s3 = inlined_call_operand.hbm [shape: f32[16,16], index: 3, kind: output, shape index: {}]
  %s4 = sld [smem:[#allocation0]]
  $region26: #{tpu_custom_call.1} parent=0
    _
  %s6 = ssub.s32 1, %s4
  %s7 = scalar_select 0, %s6, %s4
  $region1: #{tpu_custom_call.1} parent=0
    #allocation2 [shape = 'u8[8192]{0}', space=vmem, size = 0x2000, scoped, tag = 'output window, operand 0, single buffered']
    #allocation3 [shape = 's32[1]{0}', space=sflag, size = 0x4, scoped, tag = 'scoped memory for tpu_custom_call.1']
    %8 = vsyncpa [#allocation3], 0
    // Predicated region
    $region2: #{tpu_custom_call.1} parent=1 // pred_check
      _
    $region3: #{tpu_custom_call.1} parent=1 // pred_check_branch
      %10 = sbr.rel (0) target = $region5
    $region4: #{tpu_custom_call.1} parent=1 // pred_region
      _
    $region5: #{tpu_custom_call.1} parent=1 // pred_fallthru
      _
    // Predicated region
    $region6: #{tpu_custom_call.1} parent=1 // pred_check
      _
    $region7: #{tpu_custom_call.1} parent=1 // pred_check_branch
      %12 = sbr.rel (0) target = $region9
    $region8: #{tpu_custom_call.1} parent=1 // pred_region
      _
    $region9: #{tpu_custom_call.1} parent=1 // pred_fallthru
      _
    // Predicated region
    $region10: #{tpu_custom_call.1} parent=1 // pred_check
      _
    $region11: #{tpu_custom_call.1} parent=1 // pred_check_branch
      %14 = sbr.rel (0) target = $region13
    $region12: #{tpu_custom_call.1} parent=1 // pred_region
      _
    $region13: #{tpu_custom_call.1} parent=1 // pred_fallthru
      _
    %p16 = scmp.eq.s32.totalorder 0, 0
    // Predicated region
    $region14: #{tpu_custom_call.1} parent=1 // pred_check
      %p17 = pneg %p16
    $region15: #{tpu_custom_call.1} parent=1 // pred_check_branch
      %19 = sbr.rel (%p17) target = $region17
    $region16: #{tpu_custom_call.1} parent=1 // pred_region
      %v20 = vld [vmem:[%s2] sm:$0x1]
      %v22 = vlaneseq
      %v23 = vshrl.u32 %v22, 7
      %v24 = vsub.s32 0, %v23
      %v25 = vrot.slane %v20, %v24
      %vm27 = vcmask 130048
      %28 = vst.msk [vmem:[#allocation2] sm:$0xff] %vm27, %v25
      %29 = vst.msk [vmem:[#allocation2 + $0x8] sm:$0xff] %vm27, %v25
    $region17: #{tpu_custom_call.1} parent=1 // pred_fallthru
      _
    %v30 = vld [vmem:[#allocation2] sm:$0xff]
    %v31 = vld [vmem:[#allocation2 + $0x8] sm:$0xff]
    %v32 = vld [vmem:[%s0] sm:$0xf]
    %v33 = vld [vmem:[%s0 + $0x4] sm:$0xf]
    %v34 = vld [vmem:[%s1] sm:$0xf]
    %v35 = vld [vmem:[%s1 + $0x4] sm:$0xf]
    %v36 = vld [vmem:[%s1 + $0x8] sm:$0xf]
    %v37 = vld [vmem:[%s1 + $0xc] sm:$0xf]
    %v40 = vunpack.c.l.b16 %v32
    %v41 = vunpack.c.l.b16 %v33
    %v42 = vpack.c.b16 %v41, %v40
    %v47 = vunpack.c.l.b16 %v34
    %v48 = vunpack.c.l.b16 %v35
    %v49 = vunpack.c.l.b16 %v36
    %v50 = vunpack.c.l.b16 %v37
    %v51 = vpack.c.b16 %v48, %v47
    %v52 = vpack.c.b16 %v50, %v49
    %vm55 = vcmask 261120
    %v57 = vsel %vm55, %v42, 0
    %59 = vmatprep.subr.bf16.mxu0 0
    %60 = vmatpush1.bf16.msra.mxu0 %v51
    %61 = vmatprep.subr.bf16.mxu0 0
    %62 = vmatpush1.bf16.msra.mxu0 %v52
    %63 = vmatprep.subr.bf16.mxu0 0
    %64 = vmatpush1.bf16.msra.mxu0 0
    %65 = vmatprep.subr.bf16.mxu0 0
    %66 = vmatpush1.bf16.msra.mxu0 0
    %67 = vmatprep.subr.bf16.mxu0 0
    %68 = vmatpush1.bf16.msra.mxu0 0
    %69 = vmatprep.subr.bf16.mxu0 0
    %70 = vmatpush1.bf16.msra.mxu0 0
    %71 = vmatprep.subr.bf16.mxu0 0
    %72 = vmatpush1.bf16.msra.mxu0 0
    %73 = vmatprep.subr.bf16.mxu0 0
    %74 = vmatpush1.bf16.msra.mxu0 0
    %75 = vmatprep.subr.bf16.mxu0 0
    %76 = vmatpush1.bf16.msra.mxu0 0
    %77 = vmatprep.subr.bf16.mxu0 0
    %78 = vmatpush1.bf16.msra.mxu0 0
    %79 = vmatprep.subr.bf16.mxu0 0
    %80 = vmatpush1.bf16.msra.mxu0 0
    %81 = vmatprep.subr.bf16.mxu0 0
    %82 = vmatpush1.bf16.msra.mxu0 0
    %83 = vmatprep.subr.bf16.mxu0 0
    %84 = vmatpush1.bf16.msra.mxu0 0
    %85 = vmatprep.subr.bf16.mxu0 0
    %86 = vmatpush1.bf16.msra.mxu0 0
    %87 = vmatprep.subr.bf16.mxu0 0
    %88 = vmatpush1.bf16.msra.mxu0 0
    %89 = vmatprep.subr.bf16.mxu0 0
    %90 = vmatpush1.bf16.msra.mxu0 0
    %91 = vmatprep.mubr.bf16.mxu0 0
    %92 = vmatmul.mubr.bf16.gmra.mrb[0].mxu0 %v57
    %v93 = vpop.f32.mrb[0].mxu0
    %v94 = vadd.f32 0.0, %v93
    %v95 = vpop.f32.mrb[0].mxu0
    %v96 = vpop.f32.mrb[0].mxu0
    %v97 = vadd.f32 0.0, %v96
    %v98 = vpop.f32.mrb[0].mxu0
    %99 = vdwg.mxu0
    %v100 = vadd.f32 %v30, %v94
    %v101 = vadd.f32 %v31, %v97
    %vm102 = vcmask 130048
    %103 = vst.msk [vmem:[#allocation2] sm:$0xff] %vm102, %v100
    %104 = vst.msk [vmem:[#allocation2 + $0x8] sm:$0xff] %vm102, %v101
    // Predicated region
    $region18: #{tpu_custom_call.1} parent=1 // pred_check
      _
    $region19: #{tpu_custom_call.1} parent=1 // pred_check_branch
      %106 = sbr.rel (0) target = $region21
    $region20: #{tpu_custom_call.1} parent=1 // pred_region
      %s108 = ssub.s32 256, 256
      %109 = vsyncadd [#allocation3], %s108
      %s110 = sshll.u32 [#allocation2], 4
      %s111 = int_to_ptr.vmem [resolvable:$true] %s110
      %116 = dma.vmem_to_hbm [thread:$0]  %s111, 256, %s3, [#allocation3], 128, 128, 8
    $region21: #{tpu_custom_call.1} parent=1 // pred_fallthru
      _
    // Predicated region
    $region22: #{tpu_custom_call.1} parent=1 // pred_check
      _
    $region23: #{tpu_custom_call.1} parent=1 // pred_check_branch
      %118 = sbr.rel (0) target = $region25
    $region24: #{tpu_custom_call.1} parent=1 // pred_region
      %119 = dma.done [#allocation3], 256
    $region25: #{tpu_custom_call.1} parent=1 // pred_fallthru
      _
    %120 = vsyncpa [#allocation3], 1

</llo_original>
